<compile_context>
chip_gen: v5e
topology: v5e:2x2
jax: 0.10.0
libtpu: 0.0.40
codegen_flags: <defaults>
</compile_context>

<pallas_src>
import functools
import math

import jax
import jax.numpy as jnp
from jax import lax
from jax.experimental import pallas as pl
from jax.experimental.pallas import tpu as pltpu

LANES = 128
DEFAULT_TM = 4096     # rows per grid step: 4096 x 128 f32 = 2 MiB per input block
CHUNK_ROWS = 512      # rows per in-kernel compute chunk (256 KiB f32 per operand)


def _rowsum8(v):
    """(r, LANES) f32 -> (8, LANES) via vreg-to-vreg adds over the leading tile axis."""
    r = v.shape[0]
    if r == 8:
        return v
    return v.reshape(r // 8, 8, LANES).sum(axis=0)


def _dice_bce_kernel(x_ref, t_ref, prod_ref, sum_ref, bce_ref, *,
                     tm, chunk, rows, tiles_per_core, pos_weight, has_partial):
    c = pl.program_id(0)          # 'parallel' axis (megacore split on v7x)
    j = pl.program_id(1)          # reduction axis: row tiles handled by this core

    @pl.when(j == 0)
    def _init():
        prod_ref[...] = jnp.zeros_like(prod_ref)
        sum_ref[...] = jnp.zeros_like(sum_ref)
        bce_ref[...] = jnp.zeros_like(bce_ref)

    tile_row0 = (c * tiles_per_core + j) * tm     # first global row of this tile
    n_chunks = tm // chunk

    def elementwise(x, t):
        xt = x * t                                          # reused by dice and BCE
        softplus_negabs = jnp.log1p(jnp.exp(-jnp.abs(x)))   # EUP-heavy, VALU-light
        if pos_weight == 1.0:
            # BCEWithLogits, pos_weight==1 (trace-time specialized):
            #   max(x, 0) - x*t + log1p(exp(-|x|))
            bce = jnp.maximum(x, 0.0) - xt + softplus_negabs
        else:
            log_w = 1.0 + (pos_weight - 1.0) * t
            bce = (1.0 - t) * x + log_w * (softplus_negabs + jnp.maximum(-x, 0.0))
        return xt, x + t, bce

    def process(masked):
        acc_p = jnp.zeros((8, LANES), jnp.float32)
        acc_s = jnp.zeros((8, LANES), jnp.float32)
        acc_b = jnp.zeros((8, LANES), jnp.float32)
        for k in range(n_chunks):                 # static chunk slices (trace-time loop)
            r0 = k * chunk
            x = x_ref[pl.ds(r0, chunk), :].astype(jnp.float32)
            t = t_ref[pl.ds(r0, chunk), :].astype(jnp.float32)
            if masked:
                # Rows at/after `rows` are block-overrun padding (undefined data).
                nvalid = rows - (tile_row0 + r0)
                m = lax.broadcasted_iota(jnp.int32, (chunk, LANES), 0) < nvalid
                x = jnp.where(m, x, 0.0)
                t = jnp.where(m, t, 0.0)
            xt, s, bce = elementwise(x, t)
            if masked:
                bce = jnp.where(m, bce, 0.0)      # zeroed rows would otherwise add log(2)
            acc_p = acc_p + _rowsum8(xt)
            acc_s = acc_s + _rowsum8(s)
            acc_b = acc_b + _rowsum8(bce)
        prod_ref[...] += acc_p
        sum_ref[...] += acc_s
        bce_ref[...] += acc_b

    if not has_partial:
        process(masked=False)
    else:
        # At most one tile per core is partial (or an entirely-masked phantom tile),
        # so only that tile pays for the mask.
        tile_is_full = (tile_row0 + tm) <= rows

        @pl.when(tile_is_full)
        def _full():
            process(masked=False)

        @pl.when(jnp.logical_not(tile_is_full))
        def _partial():
            process(masked=True)


def dice_bce_loss(inputs, targets, smooth=1.0, ratio=0.5, weight=1.0):
    """Pallas TPU implementation of DiceBCELoss.forward (reduction='mean').

    Inputs / targets stream in their native dtype (bf16 / int8 targets are fine);
    the widening to f32 happens inside the kernel.
    """
    x = inputs.reshape(-1)
    t = targets.reshape(-1)
    n = x.shape[0]

    # 2-D (rows, 128) view with rows a multiple of 8. When numel is already a
    # multiple of 8*128 this is a free metadata reshape (no pad copy at all).
    pad = (-n) % (8 * LANES)
    if pad:
        # TODO(synk): the tail pad below is still a full HBM copy of both arrays
        # for misaligned numel; a memory_space=pl.ANY manual-DMA path could avoid it.
        x = jnp.pad(x, (0, pad))
        t = jnp.pad(t, (0, pad))
    rows = (n + pad) // LANES
    x2 = x.reshape(rows, LANES)
    t2 = t.reshape(rows, LANES)

    tm = min(DEFAULT_TM, rows)
    chunk = CHUNK_ROWS if (tm % CHUNK_ROWS == 0) else tm
    total_tiles = pl.cdiv(rows, tm)
    ncores = 2 if total_tiles > 1 else 1            # leading 'parallel' axis (v7x: 2 TCs)
    tiles_per_core = pl.cdiv(total_tiles, ncores)
    has_phantom = ncores * tiles_per_core != total_tiles
    has_partial = (rows % tm != 0) or has_phantom

    last_tile = total_tiles - 1
    if has_phantom:
        def in_idx(c, j):
            # Clamp phantom tiles to the last real block (their contribution is
            # fully masked out in the kernel).
            return (jnp.minimum(c * tiles_per_core + j, last_tile), 0)
    else:
        def in_idx(c, j):
            return (c * tiles_per_core + j, 0)

    kernel = functools.partial(
        _dice_bce_kernel,
        tm=tm, chunk=chunk, rows=rows, tiles_per_core=tiles_per_core,
        pos_weight=float(weight), has_partial=has_partial)

    acc_shape = jax.ShapeDtypeStruct((ncores, 8, LANES), jnp.float32)
    prod_p, sum_p, bce_p = pl.pallas_call(
        kernel,
        out_shape=(acc_shape, acc_shape, acc_shape),
        grid_spec=pltpu.PrefetchScalarGridSpec(
            num_scalar_prefetch=0,
            grid=(ncores, tiles_per_core),
            in_specs=[
                pl.BlockSpec((tm, LANES), in_idx),
                pl.BlockSpec((tm, LANES), in_idx),
            ],
            out_specs=(
                pl.BlockSpec((None, 8, LANES), lambda c, j: (c, 0, 0)),
                pl.BlockSpec((None, 8, LANES), lambda c, j: (c, 0, 0)),
                pl.BlockSpec((None, 8, LANES), lambda c, j: (c, 0, 0)),
            ),
        ),
        compiler_params=pltpu.CompilerParams(
            dimension_semantics=("parallel", "arbitrary"),
            vmem_limit_bytes=32 * 1024 * 1024,
        ),
    )(x2, t2)

    # Tiny cross-core combine + scalar finalize in plain JAX.
    intersection = jnp.sum(prod_p)
    sum_xt = jnp.sum(sum_p)
    # Each zero-padded element (x=0, t=0) contributes exactly log(2) to the BCE
    # sum and 0 to the dice sums.
    bce_sum = jnp.sum(bce_p) - pad * math.log(2.0)
    dice_loss = 1.0 - (2.0 * intersection + smooth) / (sum_xt + smooth)
    return (1.0 - ratio) * (bce_sum / n) + ratio * dice_loss


def _reference(inputs, targets, smooth=1.0, ratio=0.5, weight=1.0):
    x = inputs.reshape(-1).astype(jnp.float32)
    t = targets.reshape(-1).astype(jnp.float32)
    intersection = jnp.sum(x * t)
    dice = 1.0 - (2.0 * intersection + smooth) / (jnp.sum(x) + jnp.sum(t) + smooth)
    log_w = 1.0 + (weight - 1.0) * t
    bce = (1.0 - t) * x + log_w * (jnp.log1p(jnp.exp(-jnp.abs(x))) + jnp.maximum(-x, 0.0))
    return (1.0 - ratio) * jnp.mean(bce) + ratio * dice


if __name__ == "__main__":
    key = jax.random.PRNGKey(0)
    k1, k2, k3, k4 = jax.random.split(key, 4)

    # Small, aligned case (single tile, zero-copy reshape): NCHW 2x4x16x16.
    logits = jax.random.normal(k1, (2, 4, 16, 16), dtype=jnp.float32)
    targets = (jax.random.uniform(k2, (2, 4, 16, 16)) > 0.5).astype(jnp.float32)
    loss = jax.block_until_ready(dice_bce_loss(logits, targets, smooth=1.0, ratio=0.5, weight=1.0))
    ref = jax.block_until_ready(_reference(logits, targets))
    assert jnp.allclose(loss, ref, rtol=1e-5, atol=1e-5), (loss, ref)

    # Misaligned multi-tile case: exercises the tail pad + constant correction,
    # the masked partial tile, the phantom-tile clamp and the 2-way core split.
    shape2 = (1, 1, 1030, 1030)
    logits2 = jax.random.normal(k3, shape2, dtype=jnp.float32)
    targets2 = (jax.random.uniform(k4, shape2) > 0.5).astype(jnp.float32)
    loss2 = jax.block_until_ready(dice_bce_loss(logits2, targets2))
    ref2 = jax.block_until_ready(_reference(logits2, targets2))
    assert jnp.allclose(loss2, ref2, rtol=1e-5, atol=1e-5), (loss2, ref2)

    print("KERNEL_OK")
</pallas_src>

<mosaic_0001>
module attributes {stable_mosaic.version = 11 : i64} {
  func.func @_dice_bce_kernel(%arg0: i32, %arg1: i32, %arg2: memref<16x128xf32, #tpu.memory_space<vmem>>, %arg3: memref<16x128xf32, #tpu.memory_space<vmem>>, %arg4: memref<1x8x128xf32, #tpu.memory_space<vmem>>, %arg5: memref<1x8x128xf32, #tpu.memory_space<vmem>>, %arg6: memref<1x8x128xf32, #tpu.memory_space<vmem>>) attributes {dimension_semantics = [#tpu.dimension_semantics<parallel>, #tpu.dimension_semantics<arbitrary>], iteration_bounds = array<i64: 1, 1>, scalar_prefetch = 0 : i64, scratch_operands = 0 : i64, tpu.core_type = #tpu.core_type<tc>, window_params = [{transform_indices = @transform_0, window_bounds = array<i64: 16, 128>}, {transform_indices = @transform_1, window_bounds = array<i64: 16, 128>}, {transform_indices = @transform_2, window_bounds = array<i64: 1, 8, 128>}, {transform_indices = @transform_3, window_bounds = array<i64: 1, 8, 128>}, {transform_indices = @transform_4, window_bounds = array<i64: 1, 8, 128>}]} {
    %c0_i32 = arith.constant 0 : i32
    %0 = arith.cmpi eq, %arg1, %c0_i32 : i32
    %1 = arith.extui %0 : i1 to i32
    %c0_i32_0 = arith.constant 0 : i32
    %2 = arith.cmpi ne, %1, %c0_i32_0 : i32
    scf.if %2 {
      %cst_29 = arith.constant 0.000000e+00 : f32
      %46 = vector.broadcast %cst_29 : f32 to vector<8x128xf32>
      %c0_30 = arith.constant 0 : index
      %c0_31 = arith.constant 0 : index
      %c0_32 = arith.constant 0 : index
      %47 = vector.load %arg4[%c0_30, %c0_31, %c0_32] : memref<1x8x128xf32, #tpu.memory_space<vmem>>, vector<1x8x128xf32>
      %48 = vector.shape_cast %47 : vector<1x8x128xf32> to vector<8x128xf32>
      %49 = vector.shape_cast %46 : vector<8x128xf32> to vector<1x8x128xf32>
      tpu.vector_store %arg4[%c0_30, %c0_31, %c0_32], %49 {strides = array<i32>} : memref<1x8x128xf32, #tpu.memory_space<vmem>>, vector<1x8x128xf32>,
      %cst_33 = arith.constant 0.000000e+00 : f32
      %50 = vector.broadcast %cst_33 : f32 to vector<8x128xf32>
      %c0_34 = arith.constant 0 : index
      %c0_35 = arith.constant 0 : index
      %c0_36 = arith.constant 0 : index
      %51 = vector.load %arg5[%c0_34, %c0_35, %c0_36] : memref<1x8x128xf32, #tpu.memory_space<vmem>>, vector<1x8x128xf32>
      %52 = vector.shape_cast %51 : vector<1x8x128xf32> to vector<8x128xf32>
      %53 = vector.shape_cast %50 : vector<8x128xf32> to vector<1x8x128xf32>
      tpu.vector_store %arg5[%c0_34, %c0_35, %c0_36], %53 {strides = array<i32>} : memref<1x8x128xf32, #tpu.memory_space<vmem>>, vector<1x8x128xf32>,
      %cst_37 = arith.constant 0.000000e+00 : f32
      %54 = vector.broadcast %cst_37 : f32 to vector<8x128xf32>
      %c0_38 = arith.constant 0 : index
      %c0_39 = arith.constant 0 : index
      %c0_40 = arith.constant 0 : index
      %55 = vector.load %arg6[%c0_38, %c0_39, %c0_40] : memref<1x8x128xf32, #tpu.memory_space<vmem>>, vector<1x8x128xf32>
      %56 = vector.shape_cast %55 : vector<1x8x128xf32> to vector<8x128xf32>
      %57 = vector.shape_cast %54 : vector<8x128xf32> to vector<1x8x128xf32>
      tpu.vector_store %arg6[%c0_38, %c0_39, %c0_40], %57 {strides = array<i32>} : memref<1x8x128xf32, #tpu.memory_space<vmem>>, vector<1x8x128xf32>,
    } else {
    }
    %cst = arith.constant 0.000000e+00 : f32
    %3 = vector.broadcast %cst : f32 to vector<8x128xf32>
    %cst_1 = arith.constant 0.000000e+00 : f32
    %4 = vector.broadcast %cst_1 : f32 to vector<8x128xf32>
    %cst_2 = arith.constant 0.000000e+00 : f32
    %5 = vector.broadcast %cst_2 : f32 to vector<8x128xf32>
    %c0 = arith.constant 0 : index
    %c0_3 = arith.constant 0 : index
    %6 = vector.load %arg2[%c0, %c0_3] : memref<16x128xf32, #tpu.memory_space<vmem>>, vector<16x128xf32>
    %c0_4 = arith.constant 0 : index
    %c0_5 = arith.constant 0 : index
    %7 = vector.load %arg3[%c0_4, %c0_5] : memref<16x128xf32, #tpu.memory_space<vmem>>, vector<16x128xf32>
    %8 = arith.mulf %6, %7 : vector<16x128xf32>
    %9 = math.absf %6 : vector<16x128xf32>
    %cst_6 = arith.constant 0.000000e+00 : f32
    %10 = vector.broadcast %cst_6 : f32 to vector<16x128xf32>
    %11 = arith.subf %10, %9 : vector<16x128xf32>
    %12 = math.exp %11 : vector<16x128xf32>
    %13 = math.log1p %12 : vector<16x128xf32>
    %cst_7 = arith.constant 0.000000e+00 : f32
    %14 = vector.broadcast %cst_7 : f32 to vector<16x128xf32>
    %15 = arith.maximumf %6, %14 : vector<16x128xf32>
    %16 = arith.subf %15, %8 : vector<16x128xf32>
    %17 = arith.addf %16, %13 : vector<16x128xf32>
    %18 = arith.addf %6, %7 : vector<16x128xf32>
    %19 = vector.shape_cast %8 : vector<16x128xf32> to vector<2x8x128xf32>
    %cst_8 = arith.constant dense<0.000000e+00> : vector<8x128xf32>
    %20 = vector.multi_reduction <add>, %19, %cst_8 [0] : vector<2x8x128xf32> to vector<8x128xf32>
    %21 = arith.addf %3, %20 : vector<8x128xf32>
    %22 = vector.shape_cast %18 : vector<16x128xf32> to vector<2x8x128xf32>
    %cst_9 = arith.constant dense<0.000000e+00> : vector<8x128xf32>
    %23 = vector.multi_reduction <add>, %22, %cst_9 [0] : vector<2x8x128xf32> to vector<8x128xf32>
    %24 = arith.addf %4, %23 : vector<8x128xf32>
    %25 = vector.shape_cast %17 : vector<16x128xf32> to vector<2x8x128xf32>
    %cst_10 = arith.constant dense<0.000000e+00> : vector<8x128xf32>
    %26 = vector.multi_reduction <add>, %25, %cst_10 [0] : vector<2x8x128xf32> to vector<8x128xf32>
    %27 = arith.addf %5, %26 : vector<8x128xf32>
    %c0_11 = arith.constant 0 : index
    %c0_12 = arith.constant 0 : index
    %c0_13 = arith.constant 0 : index
    %28 = vector.load %arg4[%c0_11, %c0_12, %c0_13] : memref<1x8x128xf32, #tpu.memory_space<vmem>>, vector<1x8x128xf32>
    %29 = vector.shape_cast %28 : vector<1x8x128xf32> to vector<8x128xf32>
    %30 = arith.addf %29, %21 : vector<8x128xf32>
    %c0_14 = arith.constant 0 : index
    %c0_15 = arith.constant 0 : index
    %c0_16 = arith.constant 0 : index
    %31 = vector.load %arg4[%c0_14, %c0_15, %c0_16] : memref<1x8x128xf32, #tpu.memory_space<vmem>>, vector<1x8x128xf32>
    %32 = vector.shape_cast %31 : vector<1x8x128xf32> to vector<8x128xf32>
    %33 = vector.shape_cast %30 : vector<8x128xf32> to vector<1x8x128xf32>
    tpu.vector_store %arg4[%c0_14, %c0_15, %c0_16], %33 {strides = array<i32>} : memref<1x8x128xf32, #tpu.memory_space<vmem>>, vector<1x8x128xf32>,
    %c0_17 = arith.constant 0 : index
    %c0_18 = arith.constant 0 : index
    %c0_19 = arith.constant 0 : index
    %34 = vector.load %arg5[%c0_17, %c0_18, %c0_19] : memref<1x8x128xf32, #tpu.memory_space<vmem>>, vector<1x8x128xf32>
    %35 = vector.shape_cast %34 : vector<1x8x128xf32> to vector<8x128xf32>
    %36 = arith.addf %35, %24 : vector<8x128xf32>
    %c0_20 = arith.constant 0 : index
    %c0_21 = arith.constant 0 : index
    %c0_22 = arith.constant 0 : index
    %37 = vector.load %arg5[%c0_20, %c0_21, %c0_22] : memref<1x8x128xf32, #tpu.memory_space<vmem>>, vector<1x8x128xf32>
    %38 = vector.shape_cast %37 : vector<1x8x128xf32> to vector<8x128xf32>
    %39 = vector.shape_cast %36 : vector<8x128xf32> to vector<1x8x128xf32>
    tpu.vector_store %arg5[%c0_20, %c0_21, %c0_22], %39 {strides = array<i32>} : memref<1x8x128xf32, #tpu.memory_space<vmem>>, vector<1x8x128xf32>,
    %c0_23 = arith.constant 0 : index
    %c0_24 = arith.constant 0 : index
    %c0_25 = arith.constant 0 : index
    %40 = vector.load %arg6[%c0_23, %c0_24, %c0_25] : memref<1x8x128xf32, #tpu.memory_space<vmem>>, vector<1x8x128xf32>
    %41 = vector.shape_cast %40 : vector<1x8x128xf32> to vector<8x128xf32>
    %42 = arith.addf %41, %27 : vector<8x128xf32>
    %c0_26 = arith.constant 0 : index
    %c0_27 = arith.constant 0 : index
    %c0_28 = arith.constant 0 : index
    %43 = vector.load %arg6[%c0_26, %c0_27, %c0_28] : memref<1x8x128xf32, #tpu.memory_space<vmem>>, vector<1x8x128xf32>
    %44 = vector.shape_cast %43 : vector<1x8x128xf32> to vector<8x128xf32>
    %45 = vector.shape_cast %42 : vector<8x128xf32> to vector<1x8x128xf32>
    tpu.vector_store %arg6[%c0_26, %c0_27, %c0_28], %45 {strides = array<i32>} : memref<1x8x128xf32, #tpu.memory_space<vmem>>, vector<1x8x128xf32>,
    return
  }
  func.func @transform_0(%arg0: i32, %arg1: i32) -> (i32, i32) {
    %c1_i32 = arith.constant 1 : i32
    %0 = arith.muli %arg0, %c1_i32 : i32
    %1 = arith.addi %0, %arg1 : i32
    %c0_i32 = arith.constant 0 : i32
    %c0_i32_0 = arith.constant 0 : i32
    return %1, %c0_i32 : i32, i32
  }
  func.func @transform_1(%arg0: i32, %arg1: i32) -> (i32, i32) {
    %c1_i32 = arith.constant 1 : i32
    %0 = arith.muli %arg0, %c1_i32 : i32
    %1 = arith.addi %0, %arg1 : i32
    %c0_i32 = arith.constant 0 : i32
    %c0_i32_0 = arith.constant 0 : i32
    return %1, %c0_i32 : i32, i32
  }
  func.func @transform_2(%arg0: i32, %arg1: i32) -> (i32, i32, i32) {
    %c0_i32 = arith.constant 0 : i32
    %c0_i32_0 = arith.constant 0 : i32
    %c0_i32_1 = arith.constant 0 : i32
    return %arg0, %c0_i32, %c0_i32_0 : i32, i32, i32
  }
  func.func @transform_3(%arg0: i32, %arg1: i32) -> (i32, i32, i32) {
    %c0_i32 = arith.constant 0 : i32
    %c0_i32_0 = arith.constant 0 : i32
    %c0_i32_1 = arith.constant 0 : i32
    return %arg0, %c0_i32, %c0_i32_0 : i32, i32, i32
  }
  func.func @transform_4(%arg0: i32, %arg1: i32) -> (i32, i32, i32) {
    %c0_i32 = arith.constant 0 : i32
    %c0_i32_0 = arith.constant 0 : i32
    %c0_i32_1 = arith.constant 0 : i32
    return %arg0, %c0_i32, %c0_i32_0 : i32, i32, i32
  }
}

</mosaic_0001>

<llo_original>
// kernel: tpu_custom_call.1
$region0: #{tpu_custom_call.1}
  #allocation0 [shape = 'u32[]', space=smem, size = 0x4, offset = 0x4, fixed_abs, tag = 'smem constant byte address 0x4 - core index']
  #allocation1 [shape = 'u32[72,128]{1,0:T(1,128)}', space=vmem, size = 0x9000, scoped, tag = 'internal scratch']
  %s0 = inlined_call_operand.hbm [shape: f32[16,128], index: 0, kind: input, shape index: {}]
  %s1 = inlined_call_operand.hbm [shape: f32[16,128], index: 1, kind: input, shape index: {}]
  %s2 = inlined_call_operand.hbm [shape: f32[1,8,128], index: 2, kind: output, shape index: {0}]
  %s3 = inlined_call_operand.hbm [shape: f32[1,8,128], index: 3, kind: output, shape index: {1}]
  %s4 = inlined_call_operand.hbm [shape: f32[1,8,128], index: 4, kind: output, shape index: {2}]
  %5 = xla_tuple %s2, %s3, %s4
  %s6 = sld [smem:[#allocation0]]
  $region46: #{tpu_custom_call.1} parent=0
    _
  %s8 = ssub.s32 1, %s6
  %s9 = scalar_select 0, %s8, %s6
  $region1: #{tpu_custom_call.1} parent=0
    #allocation2 [shape = 'u8[8192]{0}', space=vmem, size = 0x2000, scoped, tag = 'input window, operand 0, single buffered']
    #allocation3 [shape = 's32[1]{0}', space=sflag, size = 0x4, scoped, tag = 'scoped memory for tpu_custom_call.1']
    #allocation4 [shape = 's32[1]{0}', space=sflag, size = 0x4, scoped, tag = 'scoped memory for tpu_custom_call.1']
    #allocation5 [shape = 'u8[8192]{0}', space=vmem, size = 0x2000, scoped, tag = 'input window, operand 1, single buffered']
    #allocation6 [shape = 's32[1]{0}', space=sflag, size = 0x4, scoped, tag = 'scoped memory for tpu_custom_call.1']
    #allocation7 [shape = 'u8[4096]{0}', space=vmem, size = 0x1000, scoped, tag = 'output window, operand 0, single buffered']
    #allocation8 [shape = 'u8[4096]{0}', space=vmem, size = 0x1000, scoped, tag = 'output window, operand 1, single buffered']
    #allocation9 [shape = 's32[1]{0}', space=sflag, size = 0x4, scoped, tag = 'scoped memory for tpu_custom_call.1']
    #allocation10 [shape = 'u8[4096]{0}', space=vmem, size = 0x1000, scoped, tag = 'output window, operand 2, single buffered']
    %10 = vsyncpa [#allocation3], 0
    %11 = vsyncpa [#allocation6], 0
    %12 = vsyncpa [#allocation4], 0
    %13 = vsyncpa [#allocation9], 0
    // Predicated region
    $region2: #{tpu_custom_call.1} parent=1 // pred_check
      _
    $region3: #{tpu_custom_call.1} parent=1 // pred_check_branch
      %15 = sbr.rel (0) target = $region5
    $region4: #{tpu_custom_call.1} parent=1 // pred_region
      %s16 = sadd.s32 0, 0
      %s17 = smul.u32 2, %s16
      %19 = vsyncadd [#allocation3], 0
      %s20 = smul.addr %s17, 8
      %s21 = scalar_lea.hbm %s0, %s20
      %s22 = sshll.u32 %s21, 4
      %s23 = int_to_ptr.hbm [resolvable:$true] %s22
      %s24 = sshll.u32 [#allocation2], 4
      %s25 = int_to_ptr.vmem [resolvable:$true] %s24
      %30 = dma.hbm_to_vmem [thread:$0]  %s23, 256, %s25, [#allocation3], 128, 128, 8
    $region5: #{tpu_custom_call.1} parent=1 // pred_fallthru
      _
    // Predicated region
    $region6: #{tpu_custom_call.1} parent=1 // pred_check
      _
    $region7: #{tpu_custom_call.1} parent=1 // pred_check_branch
      %32 = sbr.rel (0) target = $region9
    $region8: #{tpu_custom_call.1} parent=1 // pred_region
      %s33 = sadd.s32 0, 0
      %s34 = smul.u32 2, %s33
      %36 = vsyncadd [#allocation6], 0
      %s37 = smul.addr %s34, 8
      %s38 = scalar_lea.hbm %s1, %s37
      %s39 = sshll.u32 %s38, 4
      %s40 = int_to_ptr.hbm [resolvable:$true] %s39
      %s41 = sshll.u32 [#allocation5], 4
      %s42 = int_to_ptr.vmem [resolvable:$true] %s41
      %47 = dma.hbm_to_vmem [thread:$0]  %s40, 256, %s42, [#allocation6], 128, 128, 8
    $region9: #{tpu_custom_call.1} parent=1 // pred_fallthru
      _
    // Predicated region
    $region10: #{tpu_custom_call.1} parent=1 // pred_check
      _
    $region11: #{tpu_custom_call.1} parent=1 // pred_check_branch
      %49 = sbr.rel (0) target = $region13
    $region12: #{tpu_custom_call.1} parent=1 // pred_region
      %51 = dma.done [#allocation3], 256
    $region13: #{tpu_custom_call.1} parent=1 // pred_fallthru
      _
    // Predicated region
    $region14: #{tpu_custom_call.1} parent=1 // pred_check
      _
    $region15: #{tpu_custom_call.1} parent=1 // pred_check_branch
      %53 = sbr.rel (0) target = $region17
    $region16: #{tpu_custom_call.1} parent=1 // pred_region
      %55 = dma.done [#allocation6], 256
    $region17: #{tpu_custom_call.1} parent=1 // pred_fallthru
      _
    %s56 = sadd.s32 0, 0
    %s57 = smul.u32 2, %s56
    %s58 = sadd.s32 0, 0
    %s59 = smul.u32 2, %s58
    %p60 = scmp.eq.s32.totalorder 0, 0
    // Predicated region
    $region18: #{tpu_custom_call.1} parent=1 // pred_check
      %p61 = pneg %p60
    $region19: #{tpu_custom_call.1} parent=1 // pred_check_branch
      %63 = sbr.rel (%p61) target = $region21
    $region20: #{tpu_custom_call.1} parent=1 // pred_region
      %64 = vst [vmem:[#allocation7] sm:$0xff] 0.0
      %65 = vst [vmem:[#allocation8] sm:$0xff] 0.0
      %66 = vst [vmem:[#allocation10] sm:$0xff] 0.0
    $region21: #{tpu_custom_call.1} parent=1 // pred_fallthru
      _
    %v67 = vld [vmem:[#allocation2] sm:$0xff]
    %v68 = vld [vmem:[#allocation2 + $0x8] sm:$0xff]
    %v69 = vld [vmem:[#allocation5] sm:$0xff]
    %v70 = vld [vmem:[#allocation5 + $0x8] sm:$0xff]
    %v71 = vmul.f32 %v67, %v69
    %v72 = vmul.f32 %v68, %v70
    %v73 = vand.u32 2147483647, %v67
    %v74 = vand.u32 2147483647, %v68
    %v75 = vsub.f32 0.0, %v73
    %v76 = vsub.f32 0.0, %v74
    %v77 = vmul.f32 %v75, 1.442695
    %v78 = vpow.pop %v77
    %v79 = vmul.f32 %v76, 1.442695
    %v80 = vpow.pop %v79
    %v81 = vadd.f32 %v78, 1.0
    %v82 = vlog2.pop %v81
    %v83 = vmul.f32 %v82, 0.6931472
    %v84 = vmul.f32 -0.5, %v78
    %v85 = vadd.f32 %v84, 1.0
    %v86 = vmul.f32 %v85, %v78
    %v87 = vand.u32 2147483647, %v78
    %vm88 = vcmp.lt.f32.partialorder %v87, 0.0004427343
    %v89 = vsel %vm88, %v86, %v83
    %v90 = vadd.f32 %v80, 1.0
    %v91 = vlog2.pop %v90
    %v92 = vmul.f32 %v91, 0.6931472
    %v93 = vmul.f32 -0.5, %v80
    %v94 = vadd.f32 %v93, 1.0
    %v95 = vmul.f32 %v94, %v80
    %v96 = vand.u32 2147483647, %v80
    %vm97 = vcmp.lt.f32.partialorder %v96, 0.0004427343
    %v98 = vsel %vm97, %v95, %v92
    %v99 = vmax.f32 %v67, 0.0
    %v100 = vmax.f32 %v68, 0.0
    %v101 = vsub.f32 %v99, %v71
    %v102 = vsub.f32 %v100, %v72
    %v103 = vadd.f32 %v101, %v89
    %v104 = vadd.f32 %v102, %v98
    %v105 = vadd.f32 %v67, %v69
    %v106 = vadd.f32 %v68, %v70
    %v107 = vadd.f32 %v71, %v72
    %v108 = vadd.f32 %v107, 0.0
    %v109 = vadd.f32 %v105, %v106
    %v110 = vadd.f32 %v109, 0.0
    %v111 = vadd.f32 %v103, %v104
    %v112 = vadd.f32 %v111, 0.0
    %v113 = vld [vmem:[#allocation7] sm:$0xff]
    %v114 = vadd.f32 %v113, %v108
    %115 = vst [vmem:[#allocation7] sm:$0xff] %v114
    %v116 = vld [vmem:[#allocation8] sm:$0xff]
    %v117 = vadd.f32 %v116, %v110
    %118 = vst [vmem:[#allocation8] sm:$0xff] %v117
    %v119 = vld [vmem:[#allocation10] sm:$0xff]
    %v120 = vadd.f32 %v119, %v112
    %121 = vst [vmem:[#allocation10] sm:$0xff] %v120
    // Predicated region
    $region22: #{tpu_custom_call.1} parent=1 // pred_check
      _
    $region23: #{tpu_custom_call.1} parent=1 // pred_check_branch
      %123 = sbr.rel (0) target = $region25
    $region24: #{tpu_custom_call.1} parent=1 // pred_region
      %125 = vsyncadd [#allocation4], 0
      %s127 = sshll.u32 [#allocation7], 4
      %s128 = int_to_ptr.vmem [resolvable:$true] %s127
      %s129 = sshll.u32 %s2, 4
      %s130 = int_to_ptr.hbm [resolvable:$true] %s129
      %132 = dma.vmem_to_hbm [thread:$0]  %s128, 128, %s130, [#allocation4]
    $region25: #{tpu_custom_call.1} parent=1 // pred_fallthru
      _
    // Predicated region
    $region26: #{tpu_custom_call.1} parent=1 // pred_check
      _
    $region27: #{tpu_custom_call.1} parent=1 // pred_check_branch
      %134 = sbr.rel (0) target = $region29
    $region28: #{tpu_custom_call.1} parent=1 // pred_region
      %136 = vsyncadd [#allocation9], 0
      %s138 = sshll.u32 [#allocation8], 4
      %s139 = int_to_ptr.vmem [resolvable:$true] %s138
      %s140 = sshll.u32 %s3, 4
      %s141 = int_to_ptr.hbm [resolvable:$true] %s140
      %143 = dma.vmem_to_hbm [thread:$0]  %s139, 128, %s141, [#allocation9]
    $region29: #{tpu_custom_call.1} parent=1 // pred_fallthru
      _
    // Predicated region
    $region30: #{tpu_custom_call.1} parent=1 // pred_check
      _
    $region31: #{tpu_custom_call.1} parent=1 // pred_check_branch
      %145 = sbr.rel (0) target = $region33
    $region32: #{tpu_custom_call.1} parent=1 // pred_region
      %147 = vsyncadd [#allocation9], 0
      %s149 = sshll.u32 [#allocation10], 4
      %s150 = int_to_ptr.vmem [resolvable:$true] %s149
      %s151 = sshll.u32 %s4, 4
      %s152 = int_to_ptr.hbm [resolvable:$true] %s151
      %154 = dma.vmem_to_hbm [thread:$0]  %s150, 128, %s152, [#allocation9]
    $region33: #{tpu_custom_call.1} parent=1 // pred_fallthru
      _
    // Predicated region
    $region34: #{tpu_custom_call.1} parent=1 // pred_check
      _
    $region35: #{tpu_custom_call.1} parent=1 // pred_check_branch
      %156 = sbr.rel (0) target = $region37
    $region36: #{tpu_custom_call.1} parent=1 // pred_region
      %158 = dma.done [#allocation4], 128
    $region37: #{tpu_custom_call.1} parent=1 // pred_fallthru
      _
    // Predicated region
    $region38: #{tpu_custom_call.1} parent=1 // pred_check
      _
    $region39: #{tpu_custom_call.1} parent=1 // pred_check_branch
      %160 = sbr.rel (0) target = $region41
    $region40: #{tpu_custom_call.1} parent=1 // pred_region
      %162 = dma.done [#allocation9], 128
    $region41: #{tpu_custom_call.1} parent=1 // pred_fallthru
      _
    // Predicated region
    $region42: #{tpu_custom_call.1} parent=1 // pred_check
      _
    $region43: #{tpu_custom_call.1} parent=1 // pred_check_branch
      %164 = sbr.rel (0) target = $region45
    $region44: #{tpu_custom_call.1} parent=1 // pred_region
      %166 = dma.done [#allocation9], 128
    $region45: #{tpu_custom_call.1} parent=1 // pred_fallthru
      _
    %167 = vsyncpa [#allocation3], 1
    %168 = vsyncpa [#allocation6], 1
    %169 = vsyncpa [#allocation4], 1
    %170 = vsyncpa [#allocation9], 1

</llo_original>
